<compile_context>
chip_gen: v5e
topology: v5e:2x2
jax: 0.10.0
libtpu: 0.0.40
codegen_flags: <defaults>
</compile_context>

<pallas_src>
import numpy as np
import jax
import jax.numpy as jnp
from jax.experimental import pallas as pl
from jax.experimental.pallas import tpu as pltpu

IGNORE_INDEX = -1


def _round_up(x: int, m: int) -> int:
    return (x + m - 1) // m * m


def _interp_matrix(out_size: int, in_size: int) -> np.ndarray:
    """Dense 1-D bilinear interpolation matrix, align_corners=True. Shape (out, in)."""
    if out_size == 1:
        src = np.zeros((1,), dtype=np.float32)
    else:
        src = np.arange(out_size, dtype=np.float32) * (in_size - 1) / (out_size - 1)
    i0 = np.clip(np.floor(src).astype(np.int32), 0, in_size - 1)
    i1 = np.minimum(i0 + 1, in_size - 1)
    frac = src - i0.astype(np.float32)
    cols = np.arange(in_size)
    w0 = (cols[None, :] == i0[:, None]).astype(np.float32) * (1.0 - frac)[:, None]
    w1 = (cols[None, :] == i1[:, None]).astype(np.float32) * frac[:, None]
    return (w0 + w1).astype(np.float32)


def _vmem_capacity_bytes() -> int:
    """Per-core VMEM capacity; conservative 64 MiB (v7x) fallback."""
    try:
        cap = int(getattr(pltpu.get_tpu_info(), "vmem_capacity_bytes", 0))
        if cap > 0:
            return cap
    except Exception:
        pass
    return 64 * 1024 * 1024


def _pick_tile_h(H: int, C: int, W: int, h_pad: int, w: int, vmem_cap: int) -> int:
    """Largest multiple-of-8 tile_h whose real live set fits the VMEM budget."""
    Wp = _round_up(W, 128)
    wp = _round_up(w, 128)
    # Per-kernel-lifetime VMEM: per-batch scratch + (double-buffered) resident blocks.
    fixed = (C * h_pad * Wp * 2                 # xw scratch (bf16)
             + 2 * C * h_pad * wp * 2           # x block (bf16)
             + 2 * _round_up(w, 16) * Wp * 2    # wwt block (bf16)
             + 2 * 8 * 128 * 4)                 # partial-output block

    def per_tile(th):
        return ((C + 6) * th * Wp * 4           # C logits slices + m/se/tgt/loss temps (f32)
                + 2 * th * Wp * 4               # label block (<= int32)
                + 2 * th * _round_up(h_pad, 128) * 4)  # wh block (f32)

    budget = int(vmem_cap * 0.65)               # headroom for compiler-internal scratch
    h8 = _round_up(max(H, 8), 8)
    best, th = 8, 8
    while th <= h8:
        if fixed + per_tile(th) <= budget:
            best = th
        th += 8
    return best


def _make_kernel(C: int, h_pad: int, tile_h: int):
    def kernel(x_ref, wh_ref, wwt_ref, t_ref, out_ref, xw_ref):
        # ---- once per batch: W-interp of the low-res logits into persistent
        #      VMEM scratch, as ONE 2-D MXU matmul (M = C*h_pad, K = w, N = W).
        @pl.when(pl.program_id(1) == 0)
        def _():
            xw = jnp.dot(x_ref[0], wwt_ref[...],
                         preferred_element_type=jnp.float32)       # (C*h_pad, W)
            xw_ref[...] = xw.astype(xw_ref.dtype)

        wh_t = wh_ref[...].astype(jnp.bfloat16)    # (tile_h, h_pad) bf16 for the MXU
        t = t_ref[0].astype(jnp.int32)             # (tile_h, W) labels

        # ---- per-channel H-interp against the W-interpolated scratch (N = W),
        #      fused with a two-pass masked cross entropy (no iota / no select
        #      over a materialised (C, tile_h, W) temp).
        logits = [
            jnp.dot(wh_t, xw_ref[c * h_pad:(c + 1) * h_pad, :],
                    preferred_element_type=jnp.float32)             # (tile_h, W) f32
            for c in range(C)
        ]
        m = logits[0]
        for c in range(1, C):
            m = jnp.maximum(m, logits[c])
        se = jnp.exp(logits[0] - m)
        tgt_logit = jnp.where(t == 0, logits[0], 0.0)
        for c in range(1, C):
            se = se + jnp.exp(logits[c] - m)
            tgt_logit = tgt_logit + jnp.where(t == c, logits[c], 0.0)

        lse = m + jnp.log(se)
        valid = t != IGNORE_INDEX                  # padded rows are IGNORE_INDEX
        loss = jnp.where(valid, lse - tgt_logit, 0.0)

        # Lane-dense (8,128) per-step partial block: sublanes 0-3 carry the loss
        # sum, sublanes 4-7 the valid-pixel count (labels are read exactly once).
        row = jax.lax.broadcasted_iota(jnp.int32, (8, 128), 0)
        out_ref[0, 0] = jnp.where(row < 4,
                                  jnp.sum(loss),
                                  jnp.sum(valid.astype(jnp.float32)))

    return kernel


def seg_cross_entropy_loss(inputs, targets, tile_h=None):
    """inputs: (B, C, h, w) float logits; targets: (B, H, W) int labels (-1 = ignore)."""
    B, C, h, w = inputs.shape
    Bt, H, W = targets.shape
    assert Bt == B

    h_pad = _round_up(h, 16)                   # aligned bf16 per-channel scratch slices
    vmem_cap = _vmem_capacity_bytes()
    if tile_h is None:
        tile_h = _pick_tile_h(H, C, W, h_pad, w, vmem_cap)
    assert tile_h % 8 == 0
    H_pad = _round_up(H, tile_h)               # pad with ignored rows; no full-H fallback
    n_tiles = H_pad // tile_h

    # int16 labels halve the dominant HBM stream (v5e/v6e win); needs 16-row blocks.
    tgt_dtype = jnp.int16 if (tile_h % 16 == 0) else jnp.int32

    # ---- host-side constants / layout prep (all tiny) ---------------------------
    wh_np = np.zeros((H_pad, h_pad), dtype=np.float32)
    wh_np[:H, :h] = _interp_matrix(H, h)       # padded rows are zero (masked anyway)
    wh = jnp.asarray(wh_np)                                            # (H_pad, h_pad) f32
    wwt = jnp.asarray(_interp_matrix(W, w).T, dtype=jnp.bfloat16)      # (w, W) bf16

    x = jnp.pad(inputs.astype(jnp.bfloat16),
                ((0, 0), (0, 0), (0, h_pad - h), (0, 0)))
    x = x.reshape(B, C * h_pad, w)                                     # (B, C*h_pad, w) bf16

    tgt = jnp.pad(targets.astype(jnp.int32),
                  ((0, 0), (0, H_pad - H), (0, 0)),
                  constant_values=IGNORE_INDEX).astype(tgt_dtype)      # (B, H_pad, W)

    partials = pl.pallas_call(
        _make_kernel(C, h_pad, tile_h),
        grid=(B, n_tiles),
        in_specs=[
            pl.BlockSpec((1, C * h_pad, w), lambda b, i: (b, 0, 0)),   # x (resident per batch)
            pl.BlockSpec((tile_h, h_pad), lambda b, i: (i, 0)),        # wh row tile
            pl.BlockSpec((w, W), lambda b, i: (0, 0)),                 # wwt (constant)
            pl.BlockSpec((1, tile_h, W), lambda b, i: (b, i, 0)),      # labels tile
        ],
        out_specs=pl.BlockSpec((1, 1, 8, 128), lambda b, i: (b, i, 0, 0)),
        out_shape=jax.ShapeDtypeStruct((B, n_tiles, 8, 128), jnp.float32),
        scratch_shapes=[pltpu.VMEM((C * h_pad, W), jnp.bfloat16)],     # per-batch xw
        compiler_params=pltpu.CompilerParams(
            dimension_semantics=("parallel", "arbitrary"),
            vmem_limit_bytes=int(vmem_cap * 0.75)),
    )(x, wh, wwt, tgt)

    loss_sum = jnp.sum(partials[:, :, 0, 0])
    valid_cnt = jnp.sum(partials[:, :, 4, 0])
    # NOTE: if every pixel is ignored this is 0/0 = NaN, same as nn.CrossEntropyLoss.
    return loss_sum / valid_cnt


def _reference(inputs, targets):
    """Pure-JAX f32 reference: align_corners bilinear upsample + masked-mean CE."""
    B, C, h, w = inputs.shape
    _, H, W = targets.shape
    wh = jnp.asarray(_interp_matrix(H, h))
    ww = jnp.asarray(_interp_matrix(W, w))
    logits = jnp.einsum("Hh,bchw,Ww->bcHW", wh, inputs.astype(jnp.float32), ww)
    logits = jnp.transpose(logits, (0, 2, 3, 1)).reshape(-1, C)
    t = targets.reshape(-1)
    valid = t != IGNORE_INDEX
    lse = jax.nn.logsumexp(logits, axis=-1)
    tl = jnp.take_along_axis(logits, jnp.clip(t, 0, C - 1)[:, None], axis=-1)[:, 0]
    loss = jnp.where(valid, lse - tl, 0.0)
    return jnp.sum(loss) / jnp.sum(valid.astype(jnp.float32))


if __name__ == "__main__":
    def run_case(B, C, h, w, H, W, tile_h, key):
        kx, kt, km = jax.random.split(key, 3)
        inputs = jax.random.normal(kx, (B, C, h, w), dtype=jnp.float32)
        targets = jax.random.randint(kt, (B, H, W), 0, C, dtype=jnp.int32)
        ignore = jax.random.uniform(km, (B, H, W)) < 0.1
        targets = jnp.where(ignore, jnp.int32(IGNORE_INDEX), targets)

        out = jax.block_until_ready(seg_cross_entropy_loss(inputs, targets, tile_h=tile_h))
        ref = jax.block_until_ready(_reference(inputs, targets))
        # bf16 MXU operands vs the f32 reference -> loose-ish tolerance.
        np.testing.assert_allclose(np.asarray(out), np.asarray(ref), rtol=2e-2, atol=2e-2)

    k1, k2 = jax.random.split(jax.random.PRNGKey(0))
    # int32-label path, exact tiling (grid (2, 2)).
    run_case(B=2, C=4, h=8, w=8, H=16, W=16, tile_h=8, key=k1)
    # int16-label path + odd sizes + ignored padding rows (H=22 -> H_pad=32, grid (2, 2)).
    run_case(B=2, C=5, h=7, w=9, H=22, W=33, tile_h=16, key=k2)

    print("KERNEL_OK")
</pallas_src>

<mosaic_0001>
module attributes {stable_mosaic.version = 11 : i64} {
  func.func @kernel(%arg0: i32, %arg1: i32, %arg2: memref<1x64x8xbf16, #tpu.memory_space<vmem>>, %arg3: memref<8x16xf32, #tpu.memory_space<vmem>>, %arg4: memref<8x16xbf16, #tpu.memory_space<vmem>>, %arg5: memref<1x8x16xi32, #tpu.memory_space<vmem>>, %arg6: memref<1x1x8x128xf32, #tpu.memory_space<vmem>>, %arg7: memref<64x16xbf16, #tpu.memory_space<vmem>>) attributes {dimension_semantics = [#tpu.dimension_semantics<parallel>, #tpu.dimension_semantics<arbitrary>], iteration_bounds = array<i64: 2, 2>, scalar_prefetch = 0 : i64, scratch_operands = 1 : i64, tpu.core_type = #tpu.core_type<tc>, window_params = [{transform_indices = @transform_0, window_bounds = array<i64: 1, 64, 8>}, {transform_indices = @transform_1, window_bounds = array<i64: 8, 16>}, {pipeline_mode = #tpu.pipeline_mode<synchronous>, transform_indices = @transform_2, window_bounds = array<i64: 8, 16>}, {transform_indices = @transform_3, window_bounds = array<i64: 1, 8, 16>}, {transform_indices = @transform_4, window_bounds = array<i64: 1, 1, 8, 128>}]} {
    %c0_i32 = arith.constant 0 : i32
    %0 = arith.cmpi eq, %arg1, %c0_i32 : i32
    %1 = arith.extui %0 : i1 to i32
    %c0_i32_0 = arith.constant 0 : i32
    %2 = arith.cmpi ne, %1, %c0_i32_0 : i32
    scf.if %2 {
      %c0_25 = arith.constant 0 : index
      %c0_26 = arith.constant 0 : index
      %c0_27 = arith.constant 0 : index
      %74 = vector.load %arg2[%c0_25, %c0_26, %c0_27] : memref<1x64x8xbf16, #tpu.memory_space<vmem>>, vector<1x64x8xbf16>
      %75 = vector.shape_cast %74 : vector<1x64x8xbf16> to vector<64x8xbf16>
      %c0_28 = arith.constant 0 : index
      %c0_29 = arith.constant 0 : index
      %76 = vector.load %arg4[%c0_28, %c0_29] : memref<8x16xbf16, #tpu.memory_space<vmem>>, vector<8x16xbf16>
      %cst_30 = arith.constant dense<0.000000e+00> : vector<64x16xf32>
      %77 = tpu.matmul %75, %76, %cst_30 {dimension_numbers = #tpu.dot_dimension_numbers<[1], [0], [0], [1], [0, 0, 1, 1], [], []>} : vector<64x8xbf16>, vector<8x16xbf16>, vector<64x16xf32> -> vector<64x16xf32>
      %78 = arith.truncf %77 : vector<64x16xf32> to vector<64x16xbf16>
      %c0_31 = arith.constant 0 : index
      %c0_32 = arith.constant 0 : index
      %79 = vector.load %arg7[%c0_31, %c0_32] : memref<64x16xbf16, #tpu.memory_space<vmem>>, vector<64x16xbf16>
      tpu.vector_store %arg7[%c0_31, %c0_32], %78 {strides = array<i32>} : memref<64x16xbf16, #tpu.memory_space<vmem>>, vector<64x16xbf16>,
    } else {
    }
    %c0 = arith.constant 0 : index
    %c0_1 = arith.constant 0 : index
    %3 = vector.load %arg3[%c0, %c0_1] : memref<8x16xf32, #tpu.memory_space<vmem>>, vector<8x16xf32>
    %4 = arith.truncf %3 : vector<8x16xf32> to vector<8x16xbf16>
    %c0_2 = arith.constant 0 : index
    %c0_3 = arith.constant 0 : index
    %c0_4 = arith.constant 0 : index
    %5 = vector.load %arg5[%c0_2, %c0_3, %c0_4] : memref<1x8x16xi32, #tpu.memory_space<vmem>>, vector<1x8x16xi32>
    %6 = vector.shape_cast %5 : vector<1x8x16xi32> to vector<8x16xi32>
    %c0_5 = arith.constant 0 : index
    %c0_6 = arith.constant 0 : index
    %7 = vector.load %arg7[%c0_5, %c0_6] : memref<64x16xbf16, #tpu.memory_space<vmem>>, vector<16x16xbf16>
    %cst = arith.constant dense<0.000000e+00> : vector<8x16xf32>
    %8 = tpu.matmul %4, %7, %cst {dimension_numbers = #tpu.dot_dimension_numbers<[1], [0], [0], [1], [0, 0, 1, 1], [], []>} : vector<8x16xbf16>, vector<16x16xbf16>, vector<8x16xf32> -> vector<8x16xf32>
    %c16 = arith.constant 16 : index
    %c0_7 = arith.constant 0 : index
    %9 = vector.load %arg7[%c16, %c0_7] : memref<64x16xbf16, #tpu.memory_space<vmem>>, vector<16x16xbf16>
    %cst_8 = arith.constant dense<0.000000e+00> : vector<8x16xf32>
    %10 = tpu.matmul %4, %9, %cst_8 {dimension_numbers = #tpu.dot_dimension_numbers<[1], [0], [0], [1], [0, 0, 1, 1], [], []>} : vector<8x16xbf16>, vector<16x16xbf16>, vector<8x16xf32> -> vector<8x16xf32>
    %c32 = arith.constant 32 : index
    %c0_9 = arith.constant 0 : index
    %11 = vector.load %arg7[%c32, %c0_9] : memref<64x16xbf16, #tpu.memory_space<vmem>>, vector<16x16xbf16>
    %cst_10 = arith.constant dense<0.000000e+00> : vector<8x16xf32>
    %12 = tpu.matmul %4, %11, %cst_10 {dimension_numbers = #tpu.dot_dimension_numbers<[1], [0], [0], [1], [0, 0, 1, 1], [], []>} : vector<8x16xbf16>, vector<16x16xbf16>, vector<8x16xf32> -> vector<8x16xf32>
    %c48 = arith.constant 48 : index
    %c0_11 = arith.constant 0 : index
    %13 = vector.load %arg7[%c48, %c0_11] : memref<64x16xbf16, #tpu.memory_space<vmem>>, vector<16x16xbf16>
    %cst_12 = arith.constant dense<0.000000e+00> : vector<8x16xf32>
    %14 = tpu.matmul %4, %13, %cst_12 {dimension_numbers = #tpu.dot_dimension_numbers<[1], [0], [0], [1], [0, 0, 1, 1], [], []>} : vector<8x16xbf16>, vector<16x16xbf16>, vector<8x16xf32> -> vector<8x16xf32>
    %15 = arith.maximumf %8, %10 : vector<8x16xf32>
    %16 = arith.maximumf %15, %12 : vector<8x16xf32>
    %17 = arith.maximumf %16, %14 : vector<8x16xf32>
    %18 = arith.subf %8, %17 : vector<8x16xf32>
    %19 = math.exp %18 : vector<8x16xf32>
    %c0_i32_13 = arith.constant 0 : i32
    %20 = vector.broadcast %c0_i32_13 : i32 to vector<8x16xi32>
    %21 = arith.cmpi eq, %6, %20 : vector<8x16xi32>
    %cst_14 = arith.constant 0.000000e+00 : f32
    %22 = vector.broadcast %cst_14 : f32 to vector<8x16xf32>
    %23 = arith.select %21, %8, %22 : vector<8x16xi1>, vector<8x16xf32>
    %24 = arith.subf %10, %17 : vector<8x16xf32>
    %25 = math.exp %24 : vector<8x16xf32>
    %26 = arith.addf %19, %25 : vector<8x16xf32>
    %c1_i32 = arith.constant 1 : i32
    %27 = vector.broadcast %c1_i32 : i32 to vector<8x16xi32>
    %28 = arith.cmpi eq, %6, %27 : vector<8x16xi32>
    %cst_15 = arith.constant 0.000000e+00 : f32
    %29 = vector.broadcast %cst_15 : f32 to vector<8x16xf32>
    %30 = arith.select %28, %10, %29 : vector<8x16xi1>, vector<8x16xf32>
    %31 = arith.addf %23, %30 : vector<8x16xf32>
    %32 = arith.subf %12, %17 : vector<8x16xf32>
    %33 = math.exp %32 : vector<8x16xf32>
    %34 = arith.addf %26, %33 : vector<8x16xf32>
    %c2_i32 = arith.constant 2 : i32
    %35 = vector.broadcast %c2_i32 : i32 to vector<8x16xi32>
    %36 = arith.cmpi eq, %6, %35 : vector<8x16xi32>
    %cst_16 = arith.constant 0.000000e+00 : f32
    %37 = vector.broadcast %cst_16 : f32 to vector<8x16xf32>
    %38 = arith.select %36, %12, %37 : vector<8x16xi1>, vector<8x16xf32>
    %39 = arith.addf %31, %38 : vector<8x16xf32>
    %40 = arith.subf %14, %17 : vector<8x16xf32>
    %41 = math.exp %40 : vector<8x16xf32>
    %42 = arith.addf %34, %41 : vector<8x16xf32>
    %c3_i32 = arith.constant 3 : i32
    %43 = vector.broadcast %c3_i32 : i32 to vector<8x16xi32>
    %44 = arith.cmpi eq, %6, %43 : vector<8x16xi32>
    %cst_17 = arith.constant 0.000000e+00 : f32
    %45 = vector.broadcast %cst_17 : f32 to vector<8x16xf32>
    %46 = arith.select %44, %14, %45 : vector<8x16xi1>, vector<8x16xf32>
    %47 = arith.addf %39, %46 : vector<8x16xf32>
    %48 = math.log %42 : vector<8x16xf32>
    %49 = arith.addf %17, %48 : vector<8x16xf32>
    %c-1_i32 = arith.constant -1 : i32
    %50 = vector.broadcast %c-1_i32 : i32 to vector<8x16xi32>
    %51 = arith.cmpi ne, %6, %50 : vector<8x16xi32>
    %52 = arith.subf %49, %47 : vector<8x16xf32>
    %cst_18 = arith.constant 0.000000e+00 : f32
    %53 = vector.broadcast %cst_18 : f32 to vector<8x16xf32>
    %54 = arith.select %51, %52, %53 : vector<8x16xi1>, vector<8x16xf32>
    %55 = tpu.iota {dimensions = array<i32: 0>} : vector<8x128xi32>
    %c4_i32 = arith.constant 4 : i32
    %56 = vector.broadcast %c4_i32 : i32 to vector<8x128xi32>
    %57 = arith.cmpi slt, %55, %56 : vector<8x128xi32>
    %58 = vector.shape_cast %54 : vector<8x16xf32> to vector<1x8x16xf32>
    %cst_19 = arith.constant dense<0.000000e+00> : vector<1xf32>
    %59 = vector.multi_reduction <add>, %58, %cst_19 [1, 2] : vector<1x8x16xf32> to vector<1xf32>
    %60 = vector.shape_cast %59 : vector<1xf32> to vector<1x1x1xf32>
    %61 = vector.extract %60[0, 0, 0] : f32 from vector<1x1x1xf32>
    %62 = arith.extui %51 : vector<8x16xi1> to vector<8x16xi32>
    %63 = arith.sitofp %62 : vector<8x16xi32> to vector<8x16xf32>
    %64 = vector.shape_cast %63 : vector<8x16xf32> to vector<1x8x16xf32>
    %cst_20 = arith.constant dense<0.000000e+00> : vector<1xf32>
    %65 = vector.multi_reduction <add>, %64, %cst_20 [1, 2] : vector<1x8x16xf32> to vector<1xf32>
    %66 = vector.shape_cast %65 : vector<1xf32> to vector<1x1x1xf32>
    %67 = vector.extract %66[0, 0, 0] : f32 from vector<1x1x1xf32>
    %68 = vector.broadcast %61 : f32 to vector<8x128xf32>
    %69 = vector.broadcast %67 : f32 to vector<8x128xf32>
    %70 = arith.select %57, %68, %69 : vector<8x128xi1>, vector<8x128xf32>
    %c0_21 = arith.constant 0 : index
    %c0_22 = arith.constant 0 : index
    %c0_23 = arith.constant 0 : index
    %c0_24 = arith.constant 0 : index
    %71 = vector.load %arg6[%c0_21, %c0_22, %c0_23, %c0_24] : memref<1x1x8x128xf32, #tpu.memory_space<vmem>>, vector<1x1x8x128xf32>
    %72 = vector.shape_cast %71 : vector<1x1x8x128xf32> to vector<8x128xf32>
    %73 = vector.shape_cast %70 : vector<8x128xf32> to vector<1x1x8x128xf32>
    tpu.vector_store %arg6[%c0_21, %c0_22, %c0_23, %c0_24], %73 {strides = array<i32>} : memref<1x1x8x128xf32, #tpu.memory_space<vmem>>, vector<1x1x8x128xf32>,
    return
  }
  func.func @transform_0(%arg0: i32, %arg1: i32) -> (i32, i32, i32) {
    %c0_i32 = arith.constant 0 : i32
    %c0_i32_0 = arith.constant 0 : i32
    %c0_i32_1 = arith.constant 0 : i32
    return %arg0, %c0_i32, %c0_i32_0 : i32, i32, i32
  }
  func.func @transform_1(%arg0: i32, %arg1: i32) -> (i32, i32) {
    %c0_i32 = arith.constant 0 : i32
    %c0_i32_0 = arith.constant 0 : i32
    return %arg1, %c0_i32 : i32, i32
  }
  func.func @transform_2(%arg0: i32, %arg1: i32) -> (i32, i32) {
    %c0_i32 = arith.constant 0 : i32
    %c0_i32_0 = arith.constant 0 : i32
    %c0_i32_1 = arith.constant 0 : i32
    return %c0_i32, %c0_i32_0 : i32, i32
  }
  func.func @transform_3(%arg0: i32, %arg1: i32) -> (i32, i32, i32) {
    %c0_i32 = arith.constant 0 : i32
    %c0_i32_0 = arith.constant 0 : i32
    return %arg0, %arg1, %c0_i32 : i32, i32, i32
  }
  func.func @transform_4(%arg0: i32, %arg1: i32) -> (i32, i32, i32, i32) {
    %c0_i32 = arith.constant 0 : i32
    %c0_i32_0 = arith.constant 0 : i32
    %c0_i32_1 = arith.constant 0 : i32
    return %arg0, %arg1, %c0_i32, %c0_i32_0 : i32, i32, i32, i32
  }
}

</mosaic_0001>

<llo_original>
// kernel: tpu_custom_call.1
$region0: #{tpu_custom_call.1}
  #allocation0 [shape = 'u32[]', space=smem, size = 0x4, offset = 0x4, fixed_abs, tag = 'smem constant byte address 0x4 - core index']
  #allocation1 [shape = 'u32[72,128]{1,0:T(1,128)}', space=vmem, size = 0x9000, scoped, tag = 'internal scratch']
  #allocation2 [shape = 'bf16[64,16]{1,0:T(8,128)(2,1)}', space=vmem, size = 0x4000, scoped, tag = 'scratch operand']
  %s0 = inlined_call_operand.vmem [shape: bf16[2,64,8], index: 0, kind: input, shape index: {}]
  %s1 = inlined_call_operand.vmem [shape: f32[16,16], index: 1, kind: input, shape index: {}]
  %s2 = inlined_call_operand.vmem [shape: bf16[8,16], index: 2, kind: input, shape index: {}]
  %s3 = inlined_call_operand.vmem [shape: s32[2,16,16], index: 3, kind: input, shape index: {}]
  %s4 = inlined_call_operand.hbm [shape: f32[2,2,8,128], index: 4, kind: output, shape index: {}]
  %s5 = sld [smem:[#allocation0]]
  $region53: #{tpu_custom_call.1} parent=0
    _
  %s7 = ssub.s32 1, %s5
  %s8 = scalar_select 0, %s7, %s5
  $region1: #{tpu_custom_call.1} parent=0
    #allocation3 [shape = 'u8[8192]{0}', space=vmem, size = 0x2000, scoped, tag = 'output window, operand 0']
    #allocation4 [shape = 's32[2]{0}', space=sflag, size = 0x8, scoped, tag = 'scoped memory for tpu_custom_call.1']
    %9 = vsyncpa [#allocation4], 0
    %s10 = scalar_lea.sflag [#allocation4], 1
    %11 = vsyncpa %s10, 0
    loop: start=0, step=1, limit=6
    $region2: #{tpu_custom_call.1} parent=1 // loop_pre_header
      _
    $region3: #{tpu_custom_call.1} parent=1 // loop_header
      %s13 = sphi 0, %s17
      %p14 = scmp.ge.s32.totalorder %s13, 6
      %s20 = sphi 0, %s32
      %s21 = sphi 0, %s28
      %s22 = sphi 0, %s20
      %s23 = sphi 0, %s21
      %s24 = sphi 0, %s22
      %s25 = sphi 0, %s23
      %s35 = sphi 0, %s37
      %s38 = sphi 0, %s35
      %s39 = sphi 0, %s38
      %s55 = sphi 0, %s39
      %s61 = sphi 0, %s63
      %s64 = sphi 0, %s61
      %s65 = sphi 0, %s64
      %s81 = sphi 0, %s65
      %s85 = sphi 0, %s85
      %s87 = sphi 0, %s85
      %s88 = sphi 0, %s87
      %s102 = sphi 0, %s88
      %s110 = sphi 0, %s112
      %s113 = sphi 0, %s110
      %s114 = sphi 0, %s113
      %s130 = sphi 0, %s114
      %s138 = sphi 0, %s140
      %s141 = sphi 0, %s138
      %s142 = sphi 0, %s141
      %s158 = sphi 0, %s142
    $region4: #{tpu_custom_call.1} parent=1 // loop_header_branch
      %16 = sbr.rel (%p14) target = $region8
    $region5: #{tpu_custom_call.1} parent=1 // loop_body
      %s18 = ssub.s32 %s13, 1
      %s19 = ssub.s32 %s13, 2
      %s26 = sadd.s32 1, %s21
      %p27 = scmp.ge.s32.totalorder %s26, 2
      %s28 = scalar_select %p27, 0, %s26
      %s29 = sadd.s32 1, %s20
      %s30 = scalar_select %p27, %s29, %s20
      %p31 = scmp.ge.s32.totalorder %s30, 2
      %s32 = scalar_select %p31, 0, %s30
      %s33 = ssub.s32 %s20, %s32
      %p34 = scmp.eq.s32.totalorder %s33, 0
      %s36 = sadd.s32 %s35, 1
      %s37 = scalar_select %p34, %s35, %s36
      %p40 = pneg %p34
      %p41 = scmp.eq.s32.totalorder %s13, 3
      %p42 = por %p40, %p41
      %p43 = scmp.ne.s32.totalorder %s35, %s38
      %p44 = scmp.eq.s32.totalorder %s13, 0
      %p45 = por %p43, %p44
      %p46 = scmp.ne.s32.totalorder %s35, %s38
      %p47 = scmp.eq.s32.totalorder %s18, 3
      %p48 = por %p46, %p47
      %p49 = scmp.ne.s32.totalorder %s38, %s39
      %p50 = scmp.eq.s32.totalorder %s18, 0
      %p51 = por %p49, %p50
      %p52 = scmp.ne.s32.totalorder %s38, %s39
      %p53 = scmp.eq.s32.totalorder %s19, 3
      %p54 = por %p52, %p53
      %p56 = scmp.ne.s32.totalorder %s39, %s55
      %p57 = scmp.eq.s32.totalorder %s19, 0
      %p58 = por %p56, %p57
      %s59 = ssub.s32 %s21, %s28
      %p60 = scmp.eq.s32.totalorder %s59, 0
      %s62 = sadd.s32 %s61, 1
      %s63 = scalar_select %p60, %s61, %s62
      %p66 = pneg %p60
      %p67 = scmp.eq.s32.totalorder %s13, 3
      %p68 = por %p66, %p67
      %p69 = scmp.ne.s32.totalorder %s61, %s64
      %p70 = scmp.eq.s32.totalorder %s13, 0
      %p71 = por %p69, %p70
      %p72 = scmp.ne.s32.totalorder %s61, %s64
      %p73 = scmp.eq.s32.totalorder %s18, 3
      %p74 = por %p72, %p73
      %p75 = scmp.ne.s32.totalorder %s64, %s65
      %p76 = scmp.eq.s32.totalorder %s18, 0
      %p77 = por %p75, %p76
      %p78 = scmp.ne.s32.totalorder %s64, %s65
      %p79 = scmp.eq.s32.totalorder %s19, 3
      %p80 = por %p78, %p79
      %p82 = scmp.ne.s32.totalorder %s65, %s81
      %p83 = scmp.eq.s32.totalorder %s19, 0
      %p84 = por %p82, %p83
      %s86 = sadd.s32 %s85, 1
      %p89 = scmp.eq.s32.totalorder %s13, 3
      %p90 = scmp.ne.s32.totalorder %s85, %s87
      %p91 = scmp.eq.s32.totalorder %s13, 0
      %p92 = por %p90, %p91
      %p93 = scmp.ne.s32.totalorder %s85, %s87
      %p94 = scmp.eq.s32.totalorder %s18, 3
      %p95 = por %p93, %p94
      %p96 = scmp.ne.s32.totalorder %s87, %s88
      %p97 = scmp.eq.s32.totalorder %s18, 0
      %p98 = por %p96, %p97
      %p99 = scmp.ne.s32.totalorder %s87, %s88
      %p100 = scmp.eq.s32.totalorder %s19, 3
      %p101 = por %p99, %p100
      %p103 = scmp.ne.s32.totalorder %s88, %s102
      %p104 = scmp.eq.s32.totalorder %s19, 0
      %p105 = por %p103, %p104
      %s106 = ssub.s32 %s20, %s32
      %s107 = ssub.s32 %s21, %s28
      %s108 = sor.u32 %s106, %s107
      %p109 = scmp.eq.s32.totalorder %s108, 0
      %s111 = sadd.s32 %s110, 1
      %s112 = scalar_select %p109, %s110, %s111
      %p115 = pneg %p109
      %p116 = scmp.eq.s32.totalorder %s13, 3
      %p117 = por %p115, %p116
      %p118 = scmp.ne.s32.totalorder %s110, %s113
      %p119 = scmp.eq.s32.totalorder %s13, 0
      %p120 = por %p118, %p119
      %p121 = scmp.ne.s32.totalorder %s110, %s113
      %p122 = scmp.eq.s32.totalorder %s18, 3
      %p123 = por %p121, %p122
      %p124 = scmp.ne.s32.totalorder %s113, %s114
      %p125 = scmp.eq.s32.totalorder %s18, 0
      %p126 = por %p124, %p125
      %p127 = scmp.ne.s32.totalorder %s113, %s114
      %p128 = scmp.eq.s32.totalorder %s19, 3
      %p129 = por %p127, %p128
      %p131 = scmp.ne.s32.totalorder %s114, %s130
      %p132 = scmp.eq.s32.totalorder %s19, 0
      %p133 = por %p131, %p132
      %s134 = ssub.s32 %s20, %s32
      %s135 = ssub.s32 %s21, %s28
      %s136 = sor.u32 %s134, %s135
      %p137 = scmp.eq.s32.totalorder %s136, 0
      %s139 = sadd.s32 %s138, 1
      %s140 = scalar_select %p137, %s138, %s139
      %p143 = pneg %p137
      %p144 = scmp.eq.s32.totalorder %s13, 3
      %p145 = por %p143, %p144
      %p146 = scmp.ne.s32.totalorder %s138, %s141
      %p147 = scmp.eq.s32.totalorder %s13, 0
      %p148 = por %p146, %p147
      %p149 = scmp.ne.s32.totalorder %s138, %s141
      %p150 = scmp.eq.s32.totalorder %s18, 3
      %p151 = por %p149, %p150
      %p152 = scmp.ne.s32.totalorder %s141, %s142
      %p153 = scmp.eq.s32.totalorder %s18, 0
      %p154 = por %p152, %p153
      %p155 = scmp.ne.s32.totalorder %s141, %s142
      %p156 = scmp.eq.s32.totalorder %s19, 3
      %p157 = por %p155, %p156
      %p159 = scmp.ne.s32.totalorder %s142, %s158
      %p160 = scmp.eq.s32.totalorder %s19, 0
      %p161 = por %p159, %p160
      %p162 = scmp.le.s32.totalorder 1, %s13
      %p163 = scmp.lt.s32.totalorder %s13, 5
      %p164 = pnand %p162, %p163
      %p165 = pneg %p164
      // Predicated region
      $region9: #{tpu_custom_call.1} parent=5 // pred_check
        _
      $region10: #{tpu_custom_call.1} parent=5 // pred_check_branch
        %167 = sbr.rel (%p164) target = $region12
      $region11: #{tpu_custom_call.1} parent=5 // pred_region
        %s168 = ssub.s32 %s13, 1
        // Predicated region
        $region13: #{tpu_custom_call.1} parent=11 // pred_check
          %p169 = pneg %p98
        $region14: #{tpu_custom_call.1} parent=11 // pred_check_branch
          %171 = sbr.rel (%p169) target = $region16
        $region15: #{tpu_custom_call.1} parent=11 // pred_region
          _
        $region16: #{tpu_custom_call.1} parent=11 // pred_fallthru
          _
      $region12: #{tpu_custom_call.1} parent=5 // pred_fallthru
        _
      %p172 = scmp.lt.s32.totalorder %s13, 4
      // Predicated region
      $region17: #{tpu_custom_call.1} parent=5 // pred_check
        %p173 = pneg %p172
      $region18: #{tpu_custom_call.1} parent=5 // pred_check_branch
        %175 = sbr.rel (%p173) target = $region20
      $region19: #{tpu_custom_call.1} parent=5 // pred_region
        // Predicated region
        $region21: #{tpu_custom_call.1} parent=19 // pred_check
          %p176 = pneg %p45
        $region22: #{tpu_custom_call.1} parent=19 // pred_check_branch
          %178 = sbr.rel (%p176) target = $region24
        $region23: #{tpu_custom_call.1} parent=19 // pred_region
          %p179 = scmp.lt.s32.totalorder %s20, 1
          %s180 = scalar_select %p179, %s20, 1
          %s181 = smul.addr %s180, 8
          %s182 = smul.addr %s181, 4
          %s183 = scalar_lea.vmem %s0, %s182
        $region24: #{tpu_custom_call.1} parent=19 // pred_fallthru
          _
        // Predicated region
        $region25: #{tpu_custom_call.1} parent=19 // pred_check
          %p184 = pneg %p71
        $region26: #{tpu_custom_call.1} parent=19 // pred_check_branch
          %186 = sbr.rel (%p184) target = $region28
        $region27: #{tpu_custom_call.1} parent=19 // pred_region
          %p187 = scmp.lt.s32.totalorder %s21, 1
          %s188 = scalar_select %p187, %s21, 1
          %s189 = smul.addr %s188, 8
          %s190 = scalar_lea.vmem %s1, %s189
        $region28: #{tpu_custom_call.1} parent=19 // pred_fallthru
          _
        // Predicated region
        $region29: #{tpu_custom_call.1} parent=19 // pred_check
          %p191 = pneg %p120
        $region30: #{tpu_custom_call.1} parent=19 // pred_check_branch
          %193 = sbr.rel (%p191) target = $region32
        $region31: #{tpu_custom_call.1} parent=19 // pred_region
          %p194 = scmp.lt.s32.totalorder %s20, 1
          %s195 = scalar_select %p194, %s20, 1
          %p196 = scmp.lt.s32.totalorder %s21, 1
          %s197 = scalar_select %p196, %s21, 1
          %s198 = smul.addr %s195, 2
          %s199 = sadd.s32 %s197, %s198
          %s200 = smul.addr %s199, 8
          %s201 = scalar_lea.vmem %s3, %s200
        $region32: #{tpu_custom_call.1} parent=19 // pred_fallthru
          _
      $region20: #{tpu_custom_call.1} parent=5 // pred_fallthru
        _
      %p202 = scmp.le.s32.totalorder 1, %s13
      %p203 = scmp.lt.s32.totalorder %s13, 5
      %p204 = pnand %p202, %p203
      %p205 = pneg %p204
      // Predicated region
      $region33: #{tpu_custom_call.1} parent=5 // pred_check
        _
      $region34: #{tpu_custom_call.1} parent=5 // pred_check_branch
        %207 = sbr.rel (%p204) target = $region36
      $region35: #{tpu_custom_call.1} parent=5 // pred_region
        %s208 = ssub.s32 %s13, 1
        %p209 = scmp.lt.s32.totalorder %s22, 1
        %s210 = scalar_select %p209, %s22, 1
        %s211 = smul.addr %s210, 8
        %s212 = smul.addr %s211, 4
        %s213 = scalar_lea.vmem %s0, %s212
        %p214 = pneg %p51
        %p215 = pneg %p48
        %p216 = scmp.lt.s32.totalorder %s23, 1
        %s217 = scalar_select %p216, %s23, 1
        %s218 = smul.addr %s217, 8
        %s219 = scalar_lea.vmem %s1, %s218
        %p220 = pneg %p77
        %p221 = pneg %p74
        %p222 = pneg %p98
        %p223 = pneg %p95
        %p224 = scmp.lt.s32.totalorder %s22, 1
        %s225 = scalar_select %p224, %s22, 1
        %p226 = scmp.lt.s32.totalorder %s23, 1
        %s227 = scalar_select %p226, %s23, 1
        %s228 = smul.addr %s225, 2
        %s229 = sadd.s32 %s227, %s228
        %s230 = smul.addr %s229, 8
        %s231 = scalar_lea.vmem %s3, %s230
        %p232 = pneg %p126
        %p233 = pneg %p123
        %p234 = pneg %p154
        %p235 = pneg %p151
        %s236 = sand.u32 %s141, 1
        %s237 = scalar_lea.sflag [#allocation4], %s236
        %s238 = sand.u32 %s141, 1
        %s239 = smul.addr %s238, 8
        %s240 = scalar_lea.vmem [#allocation3], %s239
        %p241 = scmp.lt.s32.totalorder %s22, 1
        %s242 = scalar_select %p241, %s22, 1
        %s243 = smul.addr %s242, 8
        %s244 = smul.addr %s243, 4
        %s245 = scalar_lea.vmem %s0, %s244
        %p246 = scmp.lt.s32.totalorder %s23, 1
        %s247 = scalar_select %p246, %s23, 1
        %s248 = smul.addr %s247, 8
        %s249 = scalar_lea.vmem %s1, %s248
        %p250 = scmp.lt.s32.totalorder %s22, 1
        %s251 = scalar_select %p250, %s22, 1
        %p252 = scmp.lt.s32.totalorder %s23, 1
        %s253 = scalar_select %p252, %s23, 1
        %s254 = smul.addr %s251, 2
        %s255 = sadd.s32 %s253, %s254
        %s256 = smul.addr %s255, 8
        %s257 = scalar_lea.vmem %s3, %s256
        %p259 = scmp.eq.s32.totalorder %s23, 0
        // Predicated region
        $region37: #{tpu_custom_call.1} parent=35 // pred_check
          %p260 = pneg %p259
        $region38: #{tpu_custom_call.1} parent=35 // pred_check_branch
          %262 = sbr.rel (%p260) target = $region40
        $region39: #{tpu_custom_call.1} parent=35 // pred_region
          %v263 = vld [vmem:[%s245] sm:$0xf]
          %v264 = vld [vmem:[%s245 + $0x4] sm:$0xf]
          %v265 = vld [vmem:[%s245 + $0x8] sm:$0xf]
          %v266 = vld [vmem:[%s245 + $0xc] sm:$0xf]
          %v267 = vld [vmem:[%s245 + $0x10] sm:$0xf]
          %v268 = vld [vmem:[%s245 + $0x14] sm:$0xf]
          %v269 = vld [vmem:[%s245 + $0x18] sm:$0xf]
          %v270 = vld [vmem:[%s245 + $0x1c] sm:$0xf]
          %v271 = vld [vmem:[%s2] sm:$0xf]
          %v280 = vunpack.c.l.b16 %v263
          %v281 = vunpack.c.l.b16 %v264
          %v282 = vunpack.c.l.b16 %v265
          %v283 = vunpack.c.l.b16 %v266
          %v284 = vunpack.c.l.b16 %v267
          %v285 = vunpack.c.l.b16 %v268
          %v286 = vunpack.c.l.b16 %v269
          %v287 = vunpack.c.l.b16 %v270
          %v288 = vpack.c.b16 %v281, %v280
          %v289 = vpack.c.b16 %v283, %v282
          %v290 = vpack.c.b16 %v285, %v284
          %v291 = vpack.c.b16 %v287, %v286
          %vm292 = vcmask 64512
          %v294 = vsel %vm292, %v288, 0
          %v297 = vsel %vm292, %v289, 0
          %v300 = vsel %vm292, %v290, 0
          %v303 = vsel %vm292, %v291, 0
          %vm305 = vcmask 1043456
          %v307 = vsel %vm305, %v271, 0
          %309 = vmatpush.bf16.msra.mxu0 0
          %310 = vmatpush.bf16.msra.mxu0 0
          %311 = vmatpush.bf16.msra.mxu0 0
          %312 = vmatpush.bf16.msra.mxu0 0
          %313 = vmatpush.bf16.msra.mxu0 0
          %314 = vmatpush.bf16.msra.mxu0 0
          %315 = vmatpush.bf16.msra.mxu0 0
          %316 = vmatpush.bf16.msra.mxu0 %v307
          %317 = vmatmul.bf16.gmra.mxu0 %v294
          %v318 = vpop.f32.mrf.mxu0
          %v319 = vadd.f32 0.0, %v318
          %v320 = vpop.f32.mrf.mxu0
          %v321 = vadd.f32 0.0, %v320
          %322 = vmatmul.bf16.gmra.mxu0 %v297
          %v323 = vpop.f32.mrf.mxu0
          %v324 = vadd.f32 0.0, %v323
          %v325 = vpop.f32.mrf.mxu0
          %v326 = vadd.f32 0.0, %v325
          %327 = vmatmul.bf16.gmra.mxu0 %v300
          %v328 = vpop.f32.mrf.mxu0
          %v329 = vadd.f32 0.0, %v328
          %v330 = vpop.f32.mrf.mxu0
          %v331 = vadd.f32 0.0, %v330
          %332 = vmatmul.bf16.gmra.mxu0 %v303
          %v333 = vpop.f32.mrf.mxu0
          %v334 = vadd.f32 0.0, %v333
          %v335 = vpop.f32.mrf.mxu0
          %v336 = vadd.f32 0.0, %v335
          %337 = vdwg.mxu0
          %v338 = vpack.c.bf16 %v319, %v319
          %v339 = vpack.c.bf16 %v321, %v321
          %v340 = vpack.c.bf16 %v324, %v324
          %v341 = vpack.c.bf16 %v326, %v326
          %v342 = vpack.c.bf16 %v329, %v329
          %v343 = vpack.c.bf16 %v331, %v331
          %v344 = vpack.c.bf16 %v334, %v334
          %v345 = vpack.c.bf16 %v336, %v336
          %vm346 = vcmask 125952
          %347 = vst.msk [vmem:[#allocation2] sm:$0xf] %vm346, %v338
          %348 = vst.msk [vmem:[#allocation2 + $0x4] sm:$0xf] %vm346, %v339
          %349 = vst.msk [vmem:[#allocation2 + $0x8] sm:$0xf] %vm346, %v340
          %350 = vst.msk [vmem:[#allocation2 + $0xc] sm:$0xf] %vm346, %v341
          %351 = vst.msk [vmem:[#allocation2 + $0x10] sm:$0xf] %vm346, %v342
          %352 = vst.msk [vmem:[#allocation2 + $0x14] sm:$0xf] %vm346, %v343
          %353 = vst.msk [vmem:[#allocation2 + $0x18] sm:$0xf] %vm346, %v344
          %354 = vst.msk [vmem:[#allocation2 + $0x1c] sm:$0xf] %vm346, %v345
        $region40: #{tpu_custom_call.1} parent=35 // pred_fallthru
          _
        %v355 = vld [vmem:[%s249] sm:$0xff]
        %v356 = vpack.c.bf16 %v355, %v355
        %v357 = vld [vmem:[%s257] sm:$0xff]
        %v358 = vld [vmem:[#allocation2] sm:$0xf]
        %v359 = vld [vmem:[#allocation2 + $0x4] sm:$0xf]
        %v362 = vunpack.c.l.b16 %v358
        %v363 = vunpack.c.l.b16 %v359
        %v364 = vpack.c.b16 %v363, %v362
        %vm366 = vcmask 130048
        %v368 = vsel %vm366, %v356, 0
        %370 = vmatpush.bf16.msra.mxu0 0
        %371 = vmatpush.bf16.msra.mxu0 0
        %372 = vmatpush.bf16.msra.mxu0 0
        %373 = vmatpush.bf16.msra.mxu0 0
        %374 = vmatpush.bf16.msra.mxu0 0
        %375 = vmatpush.bf16.msra.mxu0 0
        %376 = vmatpush.bf16.msra.mxu0 0
        %377 = vmatpush.bf16.msra.mxu0 %v364
        %378 = vmatmul.bf16.gmra.mxu0 %v368
        %v379 = vpop.f32.mrf.mxu0
        %v380 = vadd.f32 0.0, %v379
        %v381 = vpop.f32.mrf.mxu0
        %382 = vdwg.mxu0
        %v383 = vld [vmem:[#allocation2 + $0x8] sm:$0xf]
        %v384 = vld [vmem:[#allocation2 + $0xc] sm:$0xf]
        %v387 = vunpack.c.l.b16 %v383
        %v388 = vunpack.c.l.b16 %v384
        %v389 = vpack.c.b16 %v388, %v387
        %391 = vmatpush.bf16.msra.mxu0 0
        %392 = vmatpush.bf16.msra.mxu0 0
        %393 = vmatpush.bf16.msra.mxu0 0
        %394 = vmatpush.bf16.msra.mxu0 0
        %395 = vmatpush.bf16.msra.mxu0 0
        %396 = vmatpush.bf16.msra.mxu0 0
        %397 = vmatpush.bf16.msra.mxu0 0
        %398 = vmatpush.bf16.msra.mxu0 %v389
        %399 = vmatmul.bf16.gmra.mxu0 %v368
        %v400 = vpop.f32.mrf.mxu0
        %v401 = vadd.f32 0.0, %v400
        %v402 = vpop.f32.mrf.mxu0
        %403 = vdwg.mxu0
        %v404 = vld [vmem:[#allocation2 + $0x10] sm:$0xf]
        %v405 = vld [vmem:[#allocation2 + $0x14] sm:$0xf]
        %v408 = vunpack.c.l.b16 %v404
        %v409 = vunpack.c.l.b16 %v405
        %v410 = vpack.c.b16 %v409, %v408
        %412 = vmatpush.bf16.msra.mxu0 0
        %413 = vmatpush.bf16.msra.mxu0 0
        %414 = vmatpush.bf16.msra.mxu0 0
        %415 = vmatpush.bf16.msra.mxu0 0
        %416 = vmatpush.bf16.msra.mxu0 0
        %417 = vmatpush.bf16.msra.mxu0 0
        %418 = vmatpush.bf16.msra.mxu0 0
        %419 = vmatpush.bf16.msra.mxu0 %v410
        %420 = vmatmul.bf16.gmra.mxu0 %v368
        %v421 = vpop.f32.mrf.mxu0
        %v422 = vadd.f32 0.0, %v421
        %v423 = vpop.f32.mrf.mxu0
        %424 = vdwg.mxu0
        %v425 = vld [vmem:[#allocation2 + $0x18] sm:$0xf]
        %v426 = vld [vmem:[#allocation2 + $0x1c] sm:$0xf]
        %v429 = vunpack.c.l.b16 %v425
        %v430 = vunpack.c.l.b16 %v426
        %v431 = vpack.c.b16 %v430, %v429
        %433 = vmatpush.bf16.msra.mxu0 0
        %434 = vmatpush.bf16.msra.mxu0 0
        %435 = vmatpush.bf16.msra.mxu0 0
        %436 = vmatpush.bf16.msra.mxu0 0
        %437 = vmatpush.bf16.msra.mxu0 0
        %438 = vmatpush.bf16.msra.mxu0 0
        %439 = vmatpush.bf16.msra.mxu0 0
        %440 = vmatpush.bf16.msra.mxu0 %v431
        %441 = vmatmul.bf16.gmra.mxu0 %v368
        %v442 = vpop.f32.mrf.mxu0
        %v443 = vadd.f32 0.0, %v442
        %v444 = vpop.f32.mrf.mxu0
        %445 = vdwg.mxu0
        %v446 = vmax.f32 %v380, %v401
        %v447 = vmax.f32 %v446, %v422
        %v448 = vmax.f32 %v447, %v443
        %v449 = vsub.f32 %v380, %v448
        %v450 = vmul.f32 %v449, 1.442695
        %v451 = vpow.pop %v450
        %vm452 = vcmp.eq.s32.totalorder %v357, 0
        %v453 = vsel %vm452, %v380, 0.0
        %v454 = vsub.f32 %v401, %v448
        %v455 = vmul.f32 %v454, 1.442695
        %v456 = vpow.pop %v455
        %v457 = vadd.f32 %v451, %v456
        %vm458 = vcmp.eq.s32.totalorder %v357, 1
        %v459 = vsel %vm458, %v401, 0.0
        %v460 = vadd.f32 %v453, %v459
        %v461 = vsub.f32 %v422, %v448
        %v462 = vmul.f32 %v461, 1.442695
        %v463 = vpow.pop %v462
        %v464 = vadd.f32 %v457, %v463
        %vm465 = vcmp.eq.s32.totalorder %v357, 2
        %v466 = vsel %vm465, %v422, 0.0
        %v467 = vadd.f32 %v460, %v466
        %v468 = vsub.f32 %v443, %v448
        %v469 = vmul.f32 %v468, 1.442695
        %v470 = vpow.pop %v469
        %v471 = vadd.f32 %v464, %v470
        %vm472 = vcmp.eq.s32.totalorder %v357, 3
        %v473 = vsel %vm472, %v443, 0.0
        %v474 = vadd.f32 %v467, %v473
        %v475 = vlog2.pop %v471
        %v476 = vmul.f32 %v475, 0.6931472
        %v477 = vadd.f32 %v448, %v476
        %vm478 = vcmp.ne.s32.totalorder %v357, 4294967295
        %v479 = vsub.f32 %v477, %v474
        %v480 = vsel %vm478, %v479, 0.0
        %v481 = vlaneseq
        %v482 = vshrl.u32 %v481, 7
        %vm483 = vcmp.lt.s32.totalorder %v482, 4
        %v484 = vsel %vm366, %v480, 0.0
        %485 = vadd.xlane.f32.xlu0 %v484
        %v486 = vpop.xlane.xlu0 %485
        %v487 = vrot.slane %v486, 4
        %v488 = vadd.f32 %v486, %v487
        %v489 = vrot.slane %v488, 2
        %v490 = vadd.f32 %v488, %v489
        %v491 = vrot.slane %v490, 1
        %v492 = vadd.f32 %v490, %v491
        %s493 = vtos %v492
        %v494 = vsel %vm478, 1, 0
        %v495 = vcvt.s32.f32 %v494
        %v496 = vsel %vm366, %v495, 0.0
        %497 = vadd.xlane.f32.xlu0 %v496
        %v498 = vpop.xlane.xlu0 %497
        %v499 = vrot.slane %v498, 4
        %v500 = vadd.f32 %v498, %v499
        %v501 = vrot.slane %v500, 2
        %v502 = vadd.f32 %v500, %v501
        %v503 = vrot.slane %v502, 1
        %v504 = vadd.f32 %v502, %v503
        %s505 = vtos %v504
        %v506 = vstv %s493
        %v507 = vstv %s505
        %v508 = vsel %vm483, %v506, %v507
        %509 = vst [vmem:[%s240] sm:$0xff] %v508
        %s510 = sand.u32 %s141, 1
        %s511 = scalar_lea.sflag [#allocation4], %s510
        %s512 = sand.u32 %s141, 1
        %s513 = smul.addr %s512, 8
        %s514 = scalar_lea.vmem [#allocation3], %s513
        // Predicated region
        $region41: #{tpu_custom_call.1} parent=35 // pred_check
          %p515 = pneg %p151
        $region42: #{tpu_custom_call.1} parent=35 // pred_check_branch
          %517 = sbr.rel (%p515) target = $region44
        $region43: #{tpu_custom_call.1} parent=35 // pred_region
          %519 = vsyncadd %s511, 0
          %s520 = smul.addr %s22, 2
          %s521 = sadd.s32 %s23, %s520
          %s522 = smul.addr %s521, 8
          %s523 = scalar_lea.hbm %s4, %s522
          %s525 = sshll.u32 %s514, 4
          %s526 = int_to_ptr.vmem [resolvable:$true] %s525
          %s527 = sshll.u32 %s523, 4
          %s528 = int_to_ptr.hbm [resolvable:$true] %s527
          %530 = dma.vmem_to_hbm [thread:$0]  %s526, 128, %s528, %s511
        $region44: #{tpu_custom_call.1} parent=35 // pred_fallthru
          _
      $region36: #{tpu_custom_call.1} parent=5 // pred_fallthru
        _
      %p531 = scmp.le.s32.totalorder 2, %s13
      // Predicated region
      $region45: #{tpu_custom_call.1} parent=5 // pred_check
        %p532 = pneg %p531
      $region46: #{tpu_custom_call.1} parent=5 // pred_check_branch
        %534 = sbr.rel (%p532) target = $region48
      $region47: #{tpu_custom_call.1} parent=5 // pred_region
        %s535 = ssub.s32 %s13, 2
        // Predicated region
        $region49: #{tpu_custom_call.1} parent=47 // pred_check
          %p536 = pneg %p157
        $region50: #{tpu_custom_call.1} parent=47 // pred_check_branch
          %538 = sbr.rel (%p536) target = $region52
        $region51: #{tpu_custom_call.1} parent=47 // pred_region
          %s539 = sand.u32 %s142, 1
          %s540 = scalar_lea.sflag [#allocation4], %s539
          %s541 = sand.u32 %s142, 1
          %s542 = smul.addr %s541, 8
          %s543 = scalar_lea.vmem [#allocation3], %s542
          %545 = dma.done %s540, 128
        $region52: #{tpu_custom_call.1} parent=47 // pred_fallthru
          _
      $region48: #{tpu_custom_call.1} parent=5 // pred_fallthru
        _
    $region6: #{tpu_custom_call.1} parent=1 // loop_footer
      %s17 = sadd.s32 1, %s13
    $region7: #{tpu_custom_call.1} parent=1 // loop_footer_branch
      %12 = sbr.rel target = $region3
    $region8: #{tpu_custom_call.1} parent=1 // loop_exit
      _
    %546 = vsyncpa [#allocation4], 1
    %s547 = scalar_lea.sflag [#allocation4], 1
    %548 = vsyncpa %s547, 1

</llo_original>
